<compile_context>
chip_gen: v7x
topology: tpu7x:2x2x1
jax: 0.10.0
libtpu: 0.0.40
codegen_flags: <defaults>
</compile_context>

<pallas_src>
import jax
import jax.numpy as jnp
from jax.experimental import pallas as pl
from jax.experimental.pallas import tpu as pltpu


def _round_up(x, m):
    return (x + m - 1) // m * m


def _value_kernel(s_ref, g_ref,
                  w1s_ref, w1g_ref, b1_ref,
                  w2_ref, b2_ref,
                  w3_ref,
                  out_ref):
    # Inputs arrive as f32; cast to bf16 on the VPU right before the MXU dots.
    s = s_ref[...].astype(jnp.bfloat16)          # [TB, sd]
    g = g_ref[...].astype(jnp.bfloat16)          # [TB, sd]

    # Layer 1: fused "concat" as two partial matmuls, f32 accumulation.
    h = (jnp.dot(s, w1s_ref[...], preferred_element_type=jnp.float32)
         + jnp.dot(g, w1g_ref[...], preferred_element_type=jnp.float32)
         + b1_ref[...])
    h = jnp.maximum(h, 0.0)                      # ReLU, f32

    # Layer 2: bf16 MXU matmul, f32 accumulation.
    h = jnp.dot(h.astype(w2_ref.dtype), w2_ref[...],
                preferred_element_type=jnp.float32) + b2_ref[...]
    h = jnp.maximum(h, 0.0)                      # ReLU, f32

    # Layer 3 (out_features=1): VPU multiply + lane reduce instead of a
    # 1-lane-wide MXU matmul.  (b3 is added in the wrapper.)
    w3 = w3_ref[...].astype(jnp.float32)                     # [1, H]
    out_ref[...] = jnp.sum(h * w3, axis=-1, keepdims=True)   # [TB, 1] f32


def prepare_value_params(params):
    """One-time weight prep: split W1 into state/goal blocks, cast to bf16.

    Call once and reuse; avoids per-forward-call convert ops over the weights.
    """
    (w1, b1), (w2, b2), (w3, b3) = params["layers"]
    two_sd, H = w1.shape
    sd = two_sd // 2
    return {
        "sd": sd,
        "H": H,
        "w1_s": w1[:sd].astype(jnp.bfloat16),            # [sd, H]
        "w1_g": w1[sd:].astype(jnp.bfloat16),            # [sd, H]
        "b1": b1.reshape(1, H).astype(jnp.float32),
        "w2": w2.astype(jnp.bfloat16),                   # [H, H]
        "b2": b2.reshape(1, H).astype(jnp.float32),
        "w3_row": w3.reshape(1, H).astype(jnp.bfloat16),  # [H,1] -> [1,H]
        "b3": b3.reshape(1, 1).astype(jnp.float32),
    }


def value_forward(state, goal_state, params, *, block_b=1024, num_cores=1):
    """IQL ValueFunction forward.

    params: either the raw {'layers': [(W [in,out], b [1,out]) x3]} dict or the
    output of prepare_value_params (preferred: prepare once, reuse).
    block_b: batch tile (1024-2048 recommended; per-grid-step overhead bound).
    num_cores: set to 2 on v7x so the batch grid keeps >=2 parallel steps.
    """
    if "layers" in params:
        params = prepare_value_params(params)
    sd, H = params["sd"], params["H"]

    B, in_sd = state.shape
    assert in_sd == sd and goal_state.shape == (B, sd)

    # Batch tile: as large as reasonable (amortise ~0.35 us/step overhead),
    # sublane-aligned; ragged last block is handled by Pallas (no padding).
    block_b = max(8, _round_up(block_b, 8))
    tb = min(block_b, _round_up(B, 8))
    if num_cores > 1:   # keep >= num_cores grid steps so every TC gets work
        tb = min(tb, max(8, _round_up(pl.cdiv(B, num_cores), 8)))
    grid = (pl.cdiv(B, tb),)

    # Weights/biases: full-array blocks with constant index maps -> DMA'd once,
    # resident in VMEM across all grid steps.
    def resident(shape):
        return pl.BlockSpec(shape, lambda i: (0, 0))

    out = pl.pallas_call(
        _value_kernel,
        out_shape=jax.ShapeDtypeStruct((B, 1), jnp.float32),
        grid=grid,
        in_specs=[
            pl.BlockSpec((tb, sd), lambda i: (i, 0)),   # state tile (f32)
            pl.BlockSpec((tb, sd), lambda i: (i, 0)),   # goal tile  (f32)
            resident((sd, H)),                          # W1[:sd]  bf16
            resident((sd, H)),                          # W1[sd:]  bf16
            resident((1, H)),                           # b1       f32
            resident((H, H)),                           # W2       bf16
            resident((1, H)),                           # b2       f32
            resident((1, H)),                           # w3 row   bf16
        ],
        out_specs=pl.BlockSpec((tb, 1), lambda i: (i, 0)),
        compiler_params=pltpu.CompilerParams(
            dimension_semantics=("parallel",),          # megacore on v7x
            vmem_limit_bytes=32 * 1024 * 1024,          # explicit; fits tb=2048
        ),
    )(state, goal_state,
      params["w1_s"], params["w1_g"], params["b1"],
      params["w2"], params["b2"], params["w3_row"])

    # squeeze_output=True -> [B]; scalar b3 added here (fuses with the squeeze,
    # saves a (1,1) VMEM block / DMA / input slot in the kernel).
    return out[:, 0] + params["b3"][0, 0]


def init_value_params(state_dim, hidden_dim=256, n_hidden=2, seed=0):
    """PyTorch-Linear-style init. W stored [in, out], b stored [1, out], f32."""
    dims = [state_dim * 2] + [hidden_dim] * n_hidden + [1]
    key = jax.random.PRNGKey(seed)
    layers = []
    for i in range(len(dims) - 1):
        key, kw, kb = jax.random.split(key, 3)
        fan_in = dims[i]
        bound = 1.0 / jnp.sqrt(jnp.float32(fan_in))
        w = jax.random.uniform(kw, (dims[i], dims[i + 1]), jnp.float32, -bound, bound)
        b = jax.random.uniform(kb, (1, dims[i + 1]), jnp.float32, -bound, bound)
        layers.append((w, b))
    return {"layers": layers}


def _reference(state, goal_state, params):
    """Plain-JAX reference with the same bf16 rounding points as the kernel."""
    bf = lambda x: x.astype(jnp.bfloat16).astype(jnp.float32)
    (w1, b1), (w2, b2), (w3, b3) = params["layers"]
    sa = jnp.concatenate([bf(state), bf(goal_state)], axis=1)
    h = jnp.maximum(sa @ bf(w1) + b1, 0.0)
    h = jnp.maximum(bf(h) @ bf(w2) + b2, 0.0)
    q = h @ bf(w3) + b3
    return q[:, 0]


if __name__ == "__main__":
    B, STATE_DIM, HIDDEN = 8, 4, 32

    key = jax.random.PRNGKey(0)
    k1, k2 = jax.random.split(key, 2)
    state = jax.random.normal(k1, (B, STATE_DIM), jnp.float32)
    goal_state = jax.random.normal(k2, (B, STATE_DIM), jnp.float32)

    params = init_value_params(STATE_DIM, hidden_dim=HIDDEN, n_hidden=2, seed=0)
    prepared = prepare_value_params(params)   # one-time weight cast/split

    out = jax.block_until_ready(value_forward(state, goal_state, prepared))
    ref = jax.block_until_ready(_reference(state, goal_state, params))

    assert out.shape == (B,), out.shape
    assert jnp.allclose(out, ref, atol=1e-4, rtol=1e-4), (out, ref)
    print("KERNEL_OK")
</pallas_src>

<mosaic_0001>
module attributes {stable_mosaic.version = 11 : i64} {
  func.func @_value_kernel(%arg0: i32, %arg1: memref<8x4xf32, #tpu.memory_space<vmem>>, %arg2: memref<8x4xf32, #tpu.memory_space<vmem>>, %arg3: memref<4x32xbf16, #tpu.memory_space<vmem>>, %arg4: memref<4x32xbf16, #tpu.memory_space<vmem>>, %arg5: memref<1x32xf32, #tpu.memory_space<vmem>>, %arg6: memref<32x32xbf16, #tpu.memory_space<vmem>>, %arg7: memref<1x32xf32, #tpu.memory_space<vmem>>, %arg8: memref<1x32xbf16, #tpu.memory_space<vmem>>, %arg9: memref<8x1xf32, #tpu.memory_space<vmem>>) attributes {dimension_semantics = [#tpu.dimension_semantics<parallel>], iteration_bounds = array<i64: 1>, scalar_prefetch = 0 : i64, scratch_operands = 0 : i64, tpu.core_type = #tpu.core_type<tc>, window_params = [{transform_indices = @transform_0, window_bounds = array<i64: 8, 4>}, {transform_indices = @transform_1, window_bounds = array<i64: 8, 4>}, {pipeline_mode = #tpu.pipeline_mode<synchronous>, transform_indices = @transform_2, window_bounds = array<i64: 4, 32>}, {pipeline_mode = #tpu.pipeline_mode<synchronous>, transform_indices = @transform_3, window_bounds = array<i64: 4, 32>}, {pipeline_mode = #tpu.pipeline_mode<synchronous>, transform_indices = @transform_4, window_bounds = array<i64: 1, 32>}, {pipeline_mode = #tpu.pipeline_mode<synchronous>, transform_indices = @transform_5, window_bounds = array<i64: 32, 32>}, {pipeline_mode = #tpu.pipeline_mode<synchronous>, transform_indices = @transform_6, window_bounds = array<i64: 1, 32>}, {pipeline_mode = #tpu.pipeline_mode<synchronous>, transform_indices = @transform_7, window_bounds = array<i64: 1, 32>}, {transform_indices = @transform_8, window_bounds = array<i64: 8, 1>}]} {
    %c0 = arith.constant 0 : index
    %c0_0 = arith.constant 0 : index
    %0 = vector.load %arg1[%c0, %c0_0] : memref<8x4xf32, #tpu.memory_space<vmem>>, vector<8x4xf32>
    %1 = arith.truncf %0 : vector<8x4xf32> to vector<8x4xbf16>
    %c0_1 = arith.constant 0 : index
    %c0_2 = arith.constant 0 : index
    %2 = vector.load %arg2[%c0_1, %c0_2] : memref<8x4xf32, #tpu.memory_space<vmem>>, vector<8x4xf32>
    %3 = arith.truncf %2 : vector<8x4xf32> to vector<8x4xbf16>
    %c0_3 = arith.constant 0 : index
    %c0_4 = arith.constant 0 : index
    %4 = vector.load %arg3[%c0_3, %c0_4] : memref<4x32xbf16, #tpu.memory_space<vmem>>, vector<4x32xbf16>
    %cst = arith.constant dense<0.000000e+00> : vector<8x32xf32>
    %5 = tpu.matmul %1, %4, %cst {dimension_numbers = #tpu.dot_dimension_numbers<[1], [0], [0], [1], [0, 0, 1, 1], [], []>} : vector<8x4xbf16>, vector<4x32xbf16>, vector<8x32xf32> -> vector<8x32xf32>
    %c0_5 = arith.constant 0 : index
    %c0_6 = arith.constant 0 : index
    %6 = vector.load %arg4[%c0_5, %c0_6] : memref<4x32xbf16, #tpu.memory_space<vmem>>, vector<4x32xbf16>
    %cst_7 = arith.constant dense<0.000000e+00> : vector<8x32xf32>
    %7 = tpu.matmul %3, %6, %cst_7 {dimension_numbers = #tpu.dot_dimension_numbers<[1], [0], [0], [1], [0, 0, 1, 1], [], []>} : vector<8x4xbf16>, vector<4x32xbf16>, vector<8x32xf32> -> vector<8x32xf32>
    %8 = arith.addf %5, %7 : vector<8x32xf32>
    %c0_8 = arith.constant 0 : index
    %c0_9 = arith.constant 0 : index
    %9 = vector.load %arg5[%c0_8, %c0_9] : memref<1x32xf32, #tpu.memory_space<vmem>>, vector<1x32xf32>
    %10 = vector.broadcast %9 : vector<1x32xf32> to vector<8x32xf32>
    %11 = arith.addf %8, %10 : vector<8x32xf32>
    %cst_10 = arith.constant 0.000000e+00 : f32
    %12 = vector.broadcast %cst_10 : f32 to vector<8x32xf32>
    %13 = arith.maximumf %11, %12 : vector<8x32xf32>
    %14 = arith.truncf %13 : vector<8x32xf32> to vector<8x32xbf16>
    %c0_11 = arith.constant 0 : index
    %c0_12 = arith.constant 0 : index
    %15 = vector.load %arg6[%c0_11, %c0_12] : memref<32x32xbf16, #tpu.memory_space<vmem>>, vector<32x32xbf16>
    %cst_13 = arith.constant dense<0.000000e+00> : vector<8x32xf32>
    %16 = tpu.matmul %14, %15, %cst_13 {dimension_numbers = #tpu.dot_dimension_numbers<[1], [0], [0], [1], [0, 0, 1, 1], [], []>} : vector<8x32xbf16>, vector<32x32xbf16>, vector<8x32xf32> -> vector<8x32xf32>
    %c0_14 = arith.constant 0 : index
    %c0_15 = arith.constant 0 : index
    %17 = vector.load %arg7[%c0_14, %c0_15] : memref<1x32xf32, #tpu.memory_space<vmem>>, vector<1x32xf32>
    %18 = vector.broadcast %17 : vector<1x32xf32> to vector<8x32xf32>
    %19 = arith.addf %16, %18 : vector<8x32xf32>
    %cst_16 = arith.constant 0.000000e+00 : f32
    %20 = vector.broadcast %cst_16 : f32 to vector<8x32xf32>
    %21 = arith.maximumf %19, %20 : vector<8x32xf32>
    %c0_17 = arith.constant 0 : index
    %c0_18 = arith.constant 0 : index
    %22 = vector.load %arg8[%c0_17, %c0_18] : memref<1x32xbf16, #tpu.memory_space<vmem>>, vector<1x32xbf16>
    %23 = arith.extf %22 : vector<1x32xbf16> to vector<1x32xf32>
    %24 = vector.broadcast %23 : vector<1x32xf32> to vector<8x32xf32>
    %25 = arith.mulf %21, %24 : vector<8x32xf32>
    %cst_19 = arith.constant dense<0.000000e+00> : vector<8xf32>
    %26 = vector.multi_reduction <add>, %25, %cst_19 [1] : vector<8x32xf32> to vector<8xf32>
    %27 = vector.shape_cast %26 : vector<8xf32> to vector<8x1xf32>
    %c0_20 = arith.constant 0 : index
    %c0_21 = arith.constant 0 : index
    %28 = vector.load %arg9[%c0_20, %c0_21] : memref<8x1xf32, #tpu.memory_space<vmem>>, vector<8x1xf32>
    tpu.vector_store %arg9[%c0_20, %c0_21], %27 {strides = array<i32>} : memref<8x1xf32, #tpu.memory_space<vmem>>, vector<8x1xf32>,
    return
  }
  func.func @transform_0(%arg0: i32) -> (i32, i32) {
    %c0_i32 = arith.constant 0 : i32
    %c0_i32_0 = arith.constant 0 : i32
    return %arg0, %c0_i32 : i32, i32
  }
  func.func @transform_1(%arg0: i32) -> (i32, i32) {
    %c0_i32 = arith.constant 0 : i32
    %c0_i32_0 = arith.constant 0 : i32
    return %arg0, %c0_i32 : i32, i32
  }
  func.func @transform_2(%arg0: i32) -> (i32, i32) {
    %c0_i32 = arith.constant 0 : i32
    %c0_i32_0 = arith.constant 0 : i32
    %c0_i32_1 = arith.constant 0 : i32
    return %c0_i32, %c0_i32_0 : i32, i32
  }
  func.func @transform_3(%arg0: i32) -> (i32, i32) {
    %c0_i32 = arith.constant 0 : i32
    %c0_i32_0 = arith.constant 0 : i32
    %c0_i32_1 = arith.constant 0 : i32
    return %c0_i32, %c0_i32_0 : i32, i32
  }
  func.func @transform_4(%arg0: i32) -> (i32, i32) {
    %c0_i32 = arith.constant 0 : i32
    %c0_i32_0 = arith.constant 0 : i32
    %c0_i32_1 = arith.constant 0 : i32
    return %c0_i32, %c0_i32_0 : i32, i32
  }
  func.func @transform_5(%arg0: i32) -> (i32, i32) {
    %c0_i32 = arith.constant 0 : i32
    %c0_i32_0 = arith.constant 0 : i32
    %c0_i32_1 = arith.constant 0 : i32
    return %c0_i32, %c0_i32_0 : i32, i32
  }
  func.func @transform_6(%arg0: i32) -> (i32, i32) {
    %c0_i32 = arith.constant 0 : i32
    %c0_i32_0 = arith.constant 0 : i32
    %c0_i32_1 = arith.constant 0 : i32
    return %c0_i32, %c0_i32_0 : i32, i32
  }
  func.func @transform_7(%arg0: i32) -> (i32, i32) {
    %c0_i32 = arith.constant 0 : i32
    %c0_i32_0 = arith.constant 0 : i32
    %c0_i32_1 = arith.constant 0 : i32
    return %c0_i32, %c0_i32_0 : i32, i32
  }
  func.func @transform_8(%arg0: i32) -> (i32, i32) {
    %c0_i32 = arith.constant 0 : i32
    %c0_i32_0 = arith.constant 0 : i32
    return %arg0, %c0_i32 : i32, i32
  }
}

</mosaic_0001>

<llo_original>
// kernel: tpu_custom_call.1
$region0: #{tpu_custom_call.1}
  #allocation0 [shape = 'u32[]', space=smem, size = 0x4, offset = 0x4, fixed_abs, tag = 'smem constant byte address 0x4 - core index']
  #allocation1 [shape = 'u32[144,128]{1,0:T(1,128)}', space=vmem, size = 0x12000, scoped, tag = 'internal scratch']
  %s0 = inlined_call_operand.vmem [shape: f32[8,4], index: 0, kind: input, shape index: {}]
  %s1 = inlined_call_operand.vmem [shape: f32[8,4], index: 1, kind: input, shape index: {}]
  %s2 = inlined_call_operand.vmem [shape: bf16[4,32], index: 2, kind: input, shape index: {}]
  %s3 = inlined_call_operand.vmem [shape: bf16[4,32], index: 3, kind: input, shape index: {}]
  %s4 = inlined_call_operand.vmem [shape: f32[1,32], index: 4, kind: input, shape index: {}]
  %s5 = inlined_call_operand.vmem [shape: bf16[32,32], index: 5, kind: input, shape index: {}]
  %s6 = inlined_call_operand.vmem [shape: f32[1,32], index: 6, kind: input, shape index: {}]
  %s7 = inlined_call_operand.vmem [shape: bf16[1,32], index: 7, kind: input, shape index: {}]
  %s8 = inlined_call_operand.vmem [shape: f32[8,1], index: 8, kind: output, shape index: {}]
  %s9 = sld [smem:[#allocation0]]
  $region42: #{tpu_custom_call.1} parent=0
    _
  %s11 = ssub.s32 1, %s9
  %s12 = scalar_select 0, %s11, %s9
  // Predicated region
  $region2: #{tpu_custom_call.1} parent=0 // pred_check
    _
  $region3: #{tpu_custom_call.1} parent=0 // pred_check_branch
    %14 = sbr.rel (0) target = $region5
  $region4: #{tpu_custom_call.1} parent=0 // pred_region
    _
  $region5: #{tpu_custom_call.1} parent=0 // pred_fallthru
    _
  // Predicated region
  $region6: #{tpu_custom_call.1} parent=0 // pred_check
    _
  $region7: #{tpu_custom_call.1} parent=0 // pred_check_branch
    %16 = sbr.rel (0) target = $region9
  $region8: #{tpu_custom_call.1} parent=0 // pred_region
    _
  $region9: #{tpu_custom_call.1} parent=0 // pred_fallthru
    _
  // Predicated region
  $region10: #{tpu_custom_call.1} parent=0 // pred_check
    _
  $region11: #{tpu_custom_call.1} parent=0 // pred_check_branch
    %18 = sbr.rel (0) target = $region13
  $region12: #{tpu_custom_call.1} parent=0 // pred_region
    _
  $region13: #{tpu_custom_call.1} parent=0 // pred_fallthru
    _
  // Predicated region
  $region14: #{tpu_custom_call.1} parent=0 // pred_check
    _
  $region15: #{tpu_custom_call.1} parent=0 // pred_check_branch
    %20 = sbr.rel (0) target = $region17
  $region16: #{tpu_custom_call.1} parent=0 // pred_region
    _
  $region17: #{tpu_custom_call.1} parent=0 // pred_fallthru
    _
  // Predicated region
  $region18: #{tpu_custom_call.1} parent=0 // pred_check
    _
  $region19: #{tpu_custom_call.1} parent=0 // pred_check_branch
    %22 = sbr.rel (0) target = $region21
  $region20: #{tpu_custom_call.1} parent=0 // pred_region
    _
  $region21: #{tpu_custom_call.1} parent=0 // pred_fallthru
    _
  // Predicated region
  $region22: #{tpu_custom_call.1} parent=0 // pred_check
    _
  $region23: #{tpu_custom_call.1} parent=0 // pred_check_branch
    %24 = sbr.rel (0) target = $region25
  $region24: #{tpu_custom_call.1} parent=0 // pred_region
    _
  $region25: #{tpu_custom_call.1} parent=0 // pred_fallthru
    _
  // Predicated region
  $region26: #{tpu_custom_call.1} parent=0 // pred_check
    _
  $region27: #{tpu_custom_call.1} parent=0 // pred_check_branch
    %26 = sbr.rel (0) target = $region29
  $region28: #{tpu_custom_call.1} parent=0 // pred_region
    _
  $region29: #{tpu_custom_call.1} parent=0 // pred_fallthru
    _
  // Predicated region
  $region30: #{tpu_custom_call.1} parent=0 // pred_check
    _
  $region31: #{tpu_custom_call.1} parent=0 // pred_check_branch
    %28 = sbr.rel (0) target = $region33
  $region32: #{tpu_custom_call.1} parent=0 // pred_region
    _
  $region33: #{tpu_custom_call.1} parent=0 // pred_fallthru
    _
  %v30 = vld [vmem:[%s0] sm:$0xff]
  %v31 = vpack.c.bf16 %v30, %v30
  %v32 = vld [vmem:[%s1] sm:$0xff]
  %v33 = vpack.c.bf16 %v32, %v32
  %v34 = vld [vmem:[%s2] sm:$0x3]
  %v35 = vld [vmem:[%s3] sm:$0x3]
  %vm36 = vcmask 31744
  %v38 = vsel %vm36, %v33, 0
  %vm40 = vcmask 1041408
  %v42 = vsel %vm40, %v35, 0
  %44 = vmatprep.subr.bf16.mxu0 0
  %45 = vmatpush1.bf16.msra.mxu0 %v42
  %46 = vmatprep.subr.bf16.mxu0 0
  %47 = vmatpush1.bf16.msra.mxu0 0
  %48 = vmatprep.subr.bf16.mxu0 0
  %49 = vmatpush1.bf16.msra.mxu0 0
  %50 = vmatprep.subr.bf16.mxu0 0
  %51 = vmatpush1.bf16.msra.mxu0 0
  %52 = vmatprep.subr.bf16.mxu0 0
  %53 = vmatpush1.bf16.msra.mxu0 0
  %54 = vmatprep.subr.bf16.mxu0 0
  %55 = vmatpush1.bf16.msra.mxu0 0
  %56 = vmatprep.subr.bf16.mxu0 0
  %57 = vmatpush1.bf16.msra.mxu0 0
  %58 = vmatprep.subr.bf16.mxu0 0
  %59 = vmatpush1.bf16.msra.mxu0 0
  %60 = vmatprep.subr.bf16.mxu0 0
  %61 = vmatpush1.bf16.msra.mxu0 0
  %62 = vmatprep.subr.bf16.mxu0 0
  %63 = vmatpush1.bf16.msra.mxu0 0
  %64 = vmatprep.subr.bf16.mxu0 0
  %65 = vmatpush1.bf16.msra.mxu0 0
  %66 = vmatprep.subr.bf16.mxu0 0
  %67 = vmatpush1.bf16.msra.mxu0 0
  %68 = vmatprep.subr.bf16.mxu0 0
  %69 = vmatpush1.bf16.msra.mxu0 0
  %70 = vmatprep.subr.bf16.mxu0 0
  %71 = vmatpush1.bf16.msra.mxu0 0
  %72 = vmatprep.subr.bf16.mxu0 0
  %73 = vmatpush1.bf16.msra.mxu0 0
  %74 = vmatprep.subr.bf16.mxu0 0
  %75 = vmatpush1.bf16.msra.mxu0 0
  %76 = vmatprep.mubr.bf16.mxu0 0
  %77 = vmatmul.mubr.bf16.gmra.mrb[0].mxu0 %v38
  %v78 = vpop.f32.mrb[0].mxu0
  %v79 = vadd.f32 0.0, %v78
  %v80 = vpop.f32.mrb[0].mxu0
  %v81 = vpop.f32.mrb[0].mxu0
  %v82 = vpop.f32.mrb[0].mxu0
  %83 = vdwg.mxu0
  %v85 = vsel %vm36, %v31, 0
  %v88 = vsel %vm40, %v34, 0
  %90 = vmatprep.subr.bf16.mxu0 0
  %91 = vmatpush1.bf16.msra.mxu0 %v88
  %92 = vmatprep.subr.bf16.mxu0 0
  %93 = vmatpush1.bf16.msra.mxu0 0
  %94 = vmatprep.subr.bf16.mxu0 0
  %95 = vmatpush1.bf16.msra.mxu0 0
  %96 = vmatprep.subr.bf16.mxu0 0
  %97 = vmatpush1.bf16.msra.mxu0 0
  %98 = vmatprep.subr.bf16.mxu0 0
  %99 = vmatpush1.bf16.msra.mxu0 0
  %100 = vmatprep.subr.bf16.mxu0 0
  %101 = vmatpush1.bf16.msra.mxu0 0
  %102 = vmatprep.subr.bf16.mxu0 0
  %103 = vmatpush1.bf16.msra.mxu0 0
  %104 = vmatprep.subr.bf16.mxu0 0
  %105 = vmatpush1.bf16.msra.mxu0 0
  %106 = vmatprep.subr.bf16.mxu0 0
  %107 = vmatpush1.bf16.msra.mxu0 0
  %108 = vmatprep.subr.bf16.mxu0 0
  %109 = vmatpush1.bf16.msra.mxu0 0
  %110 = vmatprep.subr.bf16.mxu0 0
  %111 = vmatpush1.bf16.msra.mxu0 0
  %112 = vmatprep.subr.bf16.mxu0 0
  %113 = vmatpush1.bf16.msra.mxu0 0
  %114 = vmatprep.subr.bf16.mxu0 0
  %115 = vmatpush1.bf16.msra.mxu0 0
  %116 = vmatprep.subr.bf16.mxu0 0
  %117 = vmatpush1.bf16.msra.mxu0 0
  %118 = vmatprep.subr.bf16.mxu0 0
  %119 = vmatpush1.bf16.msra.mxu0 0
  %120 = vmatprep.subr.bf16.mxu0 0
  %121 = vmatpush1.bf16.msra.mxu0 0
  %122 = vmatprep.mubr.bf16.mxu0 0
  %123 = vmatmul.mubr.bf16.gmra.mrb[0].mxu0 %v85
  %v124 = vpop.f32.mrb[0].mxu0
  %v125 = vadd.f32 %v79, %v124
  %v126 = vpop.f32.mrb[0].mxu0
  %v127 = vpop.f32.mrb[0].mxu0
  %v128 = vpop.f32.mrb[0].mxu0
  %129 = vdwg.mxu0
  %v130 = vld [vmem:[%s4] sm:$0x1]
  %v132 = vlaneseq
  %v133 = vshrl.u32 %v132, 7
  %v134 = vsub.s32 0, %v133
  %v135 = vrot.slane %v130, %v134
  %v137 = vadd.f32 %v125, %v135
  %v138 = vmax.f32 %v137, 0.0
  %v139 = vpack.c.bf16 %v138, %v138
  %v140 = vld [vmem:[%s5] sm:$0xf]
  %v141 = vld [vmem:[%s5 + $0x4] sm:$0xf]
  %v142 = vld [vmem:[%s5 + $0x8] sm:$0xf]
  %v143 = vld [vmem:[%s5 + $0xc] sm:$0xf]
  %v144 = vld [vmem:[%s6] sm:$0x1]
  %v146 = vlaneseq
  %v147 = vshrl.u32 %v146, 7
  %v148 = vsub.s32 0, %v147
  %v149 = vrot.slane %v144, %v148
  %v155 = vunpack.c.l.b16 %v140
  %v156 = vunpack.c.l.b16 %v141
  %v157 = vunpack.c.l.b16 %v142
  %v158 = vunpack.c.l.b16 %v143
  %v159 = vpack.c.b16 %v156, %v155
  %v160 = vpack.c.b16 %v158, %v157
  %vm163 = vcmask 261120
  %v165 = vsel %vm163, %v139, 0
  %167 = vmatprep.subr.bf16.mxu0 0
  %168 = vmatpush1.bf16.msra.mxu0 %v159
  %169 = vmatprep.subr.bf16.mxu0 0
  %170 = vmatpush1.bf16.msra.mxu0 %v160
  %171 = vmatprep.subr.bf16.mxu0 0
  %172 = vmatpush1.bf16.msra.mxu0 0
  %173 = vmatprep.subr.bf16.mxu0 0
  %174 = vmatpush1.bf16.msra.mxu0 0
  %175 = vmatprep.subr.bf16.mxu0 0
  %176 = vmatpush1.bf16.msra.mxu0 0
  %177 = vmatprep.subr.bf16.mxu0 0
  %178 = vmatpush1.bf16.msra.mxu0 0
  %179 = vmatprep.subr.bf16.mxu0 0
  %180 = vmatpush1.bf16.msra.mxu0 0
  %181 = vmatprep.subr.bf16.mxu0 0
  %182 = vmatpush1.bf16.msra.mxu0 0
  %183 = vmatprep.subr.bf16.mxu0 0
  %184 = vmatpush1.bf16.msra.mxu0 0
  %185 = vmatprep.subr.bf16.mxu0 0
  %186 = vmatpush1.bf16.msra.mxu0 0
  %187 = vmatprep.subr.bf16.mxu0 0
  %188 = vmatpush1.bf16.msra.mxu0 0
  %189 = vmatprep.subr.bf16.mxu0 0
  %190 = vmatpush1.bf16.msra.mxu0 0
  %191 = vmatprep.subr.bf16.mxu0 0
  %192 = vmatpush1.bf16.msra.mxu0 0
  %193 = vmatprep.subr.bf16.mxu0 0
  %194 = vmatpush1.bf16.msra.mxu0 0
  %195 = vmatprep.subr.bf16.mxu0 0
  %196 = vmatpush1.bf16.msra.mxu0 0
  %197 = vmatprep.subr.bf16.mxu0 0
  %198 = vmatpush1.bf16.msra.mxu0 0
  %199 = vmatprep.mubr.bf16.mxu0 0
  %200 = vmatmul.mubr.bf16.gmra.mrb[0].mxu0 %v165
  %v201 = vpop.f32.mrb[0].mxu0
  %v202 = vadd.f32 %v149, %v201
  %v203 = vpop.f32.mrb[0].mxu0
  %v204 = vpop.f32.mrb[0].mxu0
  %v205 = vpop.f32.mrb[0].mxu0
  %206 = vdwg.mxu0
  %v207 = vmax.f32 %v202, 0.0
  %v208 = vld [vmem:[%s7] sm:$0x1]
  %v209 = vunpack.c.l.bf16 %v208
  %v210 = vlaneseq
  %v211 = vshrl.u32 %v210, 7
  %v212 = vsub.s32 0, %v211
  %v213 = vrot.slane %v209, %v212
  %v214 = vmul.f32 %v207, %v213
  %v215 = vsel %vm163, %v214, 0.0
  %216 = vadd.xlane.f32.xlu0 %v215
  %v217 = vpop.xlane.xlu0 %216
  %vm218 = vcmask 7168
  %219 = vst.msk [vmem:[%s8] sm:$0xff] %vm218, %v217
  // Predicated region
  $region34: #{tpu_custom_call.1} parent=0 // pred_check
    _
  $region35: #{tpu_custom_call.1} parent=0 // pred_check_branch
    %221 = sbr.rel (0) target = $region37
  $region36: #{tpu_custom_call.1} parent=0 // pred_region
    _
  $region37: #{tpu_custom_call.1} parent=0 // pred_fallthru
    _
  // Predicated region
  $region38: #{tpu_custom_call.1} parent=0 // pred_check
    _
  $region39: #{tpu_custom_call.1} parent=0 // pred_check_branch
    %223 = sbr.rel (0) target = $region41
  $region40: #{tpu_custom_call.1} parent=0 // pred_region
    _
  $region41: #{tpu_custom_call.1} parent=0 // pred_fallthru
    _

</llo_original>
